<compile_context>
chip_gen: v7x
topology: tpu7x:2x2x1
jax: 0.10.0
libtpu: 0.0.40
codegen_flags: <defaults>
</compile_context>

<pallas_src>
import functools

import jax
import jax.numpy as jnp
from jax import lax
from jax.experimental import pallas as pl
from jax.experimental.pallas import tpu as pltpu

LANES = 128
SUBLANES = 8
_MAX_SUBLANES_PER_STEP = 512            # 512x128 f32 = 256 KiB per channel per step
_TARGET_BYTES_PER_STEP = 2 * 1024 * 1024


def _round_up(x, m):
    return ((x + m - 1) // m) * m


def _combined_loss_kernel(preds_ref, tgt_ref, acc_ref, *, hw, hw_pad):
    # preds_ref: (Bb, 2, S_blk, 128) logits (any float dtype; upcast to f32 here)
    # tgt_ref:   (Bb, S_blk, 128) integer class ids (0 = background, 1 = foreground)
    # acc_ref:   (4, Bb, 8, 128) f32 accumulator = kernel output, resident across the
    #            spatial ("arbitrary") grid axis.
    s = pl.program_id(1)
    bb, s_blk, _ = tgt_ref.shape

    @pl.when(s == 0)
    def _init():
        acc_ref[...] = jnp.zeros_like(acc_ref)

    lg_bg = preds_ref[:, 0].astype(jnp.float32)        # (Bb, S_blk, 128)
    lg_fg = preds_ref[:, 1].astype(jnp.float32)
    d = lg_fg - lg_bg                                  # foreground-vs-background margin
    tgt = tgt_ref[...]
    t_f = tgt.astype(jnp.float32)
    is_fg = tgt == 1

    # Stable sigmoid + per-pixel cross-entropy sharing a single exp per pixel.
    e = jnp.exp(-jnp.abs(d))
    inv = 1.0 / (1.0 + e)
    p = jnp.where(d >= 0, inv, e * inv)                # softmax(preds, axis=C)[:, 1]
    x = jnp.where(is_fg, -d, d)
    ce = jnp.maximum(x, 0.0) + jnp.log(1.0 + e)        # softplus(x) == -log p_target

    if hw_pad != hw:
        # Mask the padded tail of the flattened spatial axis.  Padded targets are zero
        # already (so t_f and p*t_f vanish there); only p and ce need masking.
        row = lax.broadcasted_iota(jnp.int32, (bb, s_blk, LANES), 1)
        col = lax.broadcasted_iota(jnp.int32, (bb, s_blk, LANES), 2)
        gidx = (s * s_blk + row) * LANES + col
        valid = gidx < hw
        p = jnp.where(valid, p, 0.0)
        ce = jnp.where(valid, ce, 0.0)

    def fold(v):  # (Bb, S_blk, 128) -> (Bb, 8, 128): pure vreg-wise adds, no XLU reduce
        return jnp.sum(v.reshape(bb, s_blk // SUBLANES, SUBLANES, LANES), axis=1)

    for k, v in enumerate((p * t_f, p, t_f, ce)):
        acc_ref[k] += fold(v)


@jax.jit
def combined_loss(preds, targets, smooth=1e-6):
    B, C, H, W = preds.shape
    if C != 2:
        # TODO(synk): general multi-class CE path; the reference DiceLoss is binary-only.
        raise NotImplementedError("combined_loss kernel assumes binary segmentation (C == 2)")

    hw = H * W
    n_sub = pl.cdiv(hw, LANES)
    s_pad = _round_up(n_sub, SUBLANES)
    if s_pad > _MAX_SUBLANES_PER_STEP:                 # tile spatially for big images
        s_blk = _MAX_SUBLANES_PER_STEP
        s_pad = _round_up(s_pad, s_blk)
    else:
        s_blk = s_pad
    n_s = s_pad // s_blk
    hw_pad = s_pad * LANES

    # Lane-dense reshape (free for contiguous NCHW); pad only if hw is not a multiple.
    preds_flat = preds.reshape(B, C, hw)
    tgt_flat = targets.reshape(B, hw)                  # keep native integer dtype
    if hw_pad != hw:
        preds_flat = jnp.pad(preds_flat, ((0, 0), (0, 0), (0, hw_pad - hw)))
        tgt_flat = jnp.pad(tgt_flat, ((0, 0), (0, hw_pad - hw)))
    preds_r = preds_flat.reshape(B, C, s_pad, LANES)
    tgt_r = tgt_flat.reshape(B, s_pad, LANES)

    # Block several batch elements per grid step when single images are small, so the
    # ~0.35us per-step fixed overhead is amortized over >= ~1-2 MiB of data.
    if n_s == 1:
        bytes_per_b = (C * preds_r.dtype.itemsize + tgt_r.dtype.itemsize) * s_pad * LANES
        cap = max(1, _TARGET_BYTES_PER_STEP // bytes_per_b)
        bb = 1
        for div in range(1, B + 1):
            if B % div == 0 and div <= cap:
                bb = div
    else:
        bb = 1

    kernel = functools.partial(_combined_loss_kernel, hw=hw, hw_pad=hw_pad)
    acc = pl.pallas_call(
        kernel,
        out_shape=jax.ShapeDtypeStruct((4, B, SUBLANES, LANES), jnp.float32),
        grid_spec=pltpu.PrefetchScalarGridSpec(
            num_scalar_prefetch=0,
            grid=(B // bb, n_s),
            in_specs=[
                pl.BlockSpec((bb, C, s_blk, LANES), lambda b, si: (b, 0, si, 0)),
                pl.BlockSpec((bb, s_blk, LANES), lambda b, si: (b, si, 0)),
            ],
            out_specs=pl.BlockSpec((4, bb, SUBLANES, LANES), lambda b, si: (0, b, 0, 0)),
        ),
        compiler_params=pltpu.CompilerParams(
            dimension_semantics=("parallel", "arbitrary"),   # batch shards across TCs (v7x)
            vmem_limit_bytes=32 * 1024 * 1024,
        ),
    )(preds_r, tgt_r)

    # Tiny O(B) finalization in plain JAX.
    stats = jnp.sum(acc, axis=(2, 3))                  # (4, B)
    inter, psum, tsum, ce_sum = stats[0], stats[1], stats[2], stats[3]
    dice = (2.0 * inter + smooth) / (psum + tsum + smooth)
    dice_loss = 1.0 - jnp.mean(dice)
    ce = jnp.sum(ce_sum) / (B * hw)
    return dice_loss + ce


def _reference_combined_loss(preds, targets, smooth=1e-6):
    """Pure-JAX reference mirroring the PyTorch module."""
    probs = jax.nn.softmax(preds, axis=1)[:, 1]                    # (B, H, W)
    t = targets.astype(jnp.float32)
    inter = jnp.sum(probs * t, axis=(1, 2))
    union = jnp.sum(probs, axis=(1, 2)) + jnp.sum(t, axis=(1, 2))
    dice = (2.0 * inter + smooth) / (union + smooth)
    dice_loss = 1.0 - jnp.mean(dice)

    logp = jax.nn.log_softmax(preds, axis=1)                       # (B, C, H, W)
    nll = -jnp.take_along_axis(
        logp, targets[:, None, :, :].astype(jnp.int32), axis=1)[:, 0]
    ce = jnp.mean(nll)
    return dice_loss + ce


if __name__ == "__main__":
    root = jax.random.PRNGKey(0)

    def run_case(B, C, H, W, key):
        k_logits, k_tgt = jax.random.split(key)
        preds = jax.random.normal(k_logits, (B, C, H, W), dtype=jnp.float32)
        targets = jax.random.randint(k_tgt, (B, H, W), 0, C, dtype=jnp.int32)
        loss = jax.block_until_ready(combined_loss(preds, targets))
        ref = _reference_combined_loss(preds, targets)
        assert jnp.allclose(loss, ref, rtol=1e-5, atol=1e-5), ((B, C, H, W), loss, ref)

    keys = jax.random.split(root, 3)
    run_case(2, 2, 16, 16, keys[0])    # small shape: batch-blocked single step + tail mask
    run_case(2, 2, 96, 96, keys[1])    # exact lane-dense multiple: no padding/mask path
    run_case(2, 2, 260, 260, keys[2])  # multi-spatial-block accumulation path
    print("KERNEL_OK")
</pallas_src>

<mosaic_0001>
module attributes {stable_mosaic.version = 11 : i64} {
  func.func @_combined_loss_kernel(%arg0: i32, %arg1: i32, %arg2: memref<2x2x8x128xf32, #tpu.memory_space<vmem>>, %arg3: memref<2x8x128xi32, #tpu.memory_space<vmem>>, %arg4: memref<4x2x8x128xf32, #tpu.memory_space<vmem>>) attributes {dimension_semantics = [#tpu.dimension_semantics<parallel>, #tpu.dimension_semantics<arbitrary>], iteration_bounds = array<i64: 1, 1>, scalar_prefetch = 0 : i64, scratch_operands = 0 : i64, tpu.core_type = #tpu.core_type<tc>, window_params = [{transform_indices = @transform_0, window_bounds = array<i64: 2, 2, 8, 128>}, {transform_indices = @transform_1, window_bounds = array<i64: 2, 8, 128>}, {transform_indices = @transform_2, window_bounds = array<i64: 4, 2, 8, 128>}]} {
    %c0_i32 = arith.constant 0 : i32
    %0 = arith.cmpi eq, %arg1, %c0_i32 : i32
    %1 = arith.extui %0 : i1 to i32
    %c0_i32_0 = arith.constant 0 : i32
    %2 = arith.cmpi ne, %1, %c0_i32_0 : i32
    scf.if %2 {
      %cst_52 = arith.constant 0.000000e+00 : f32
      %80 = vector.broadcast %cst_52 : f32 to vector<4x2x8x128xf32>
      %c0_53 = arith.constant 0 : index
      %c0_54 = arith.constant 0 : index
      %c0_55 = arith.constant 0 : index
      %c0_56 = arith.constant 0 : index
      %81 = vector.load %arg4[%c0_53, %c0_54, %c0_55, %c0_56] : memref<4x2x8x128xf32, #tpu.memory_space<vmem>>, vector<4x2x8x128xf32>
      tpu.vector_store %arg4[%c0_53, %c0_54, %c0_55, %c0_56], %80 {strides = array<i32>} : memref<4x2x8x128xf32, #tpu.memory_space<vmem>>, vector<4x2x8x128xf32>,
    } else {
    }
    %c0 = arith.constant 0 : index
    %c0_1 = arith.constant 0 : index
    %c0_2 = arith.constant 0 : index
    %c0_3 = arith.constant 0 : index
    %3 = vector.load %arg2[%c0, %c0_1, %c0_2, %c0_3] : memref<2x2x8x128xf32, #tpu.memory_space<vmem>>, vector<2x1x8x128xf32>
    %4 = vector.shape_cast %3 : vector<2x1x8x128xf32> to vector<2x8x128xf32>
    %c0_4 = arith.constant 0 : index
    %c1 = arith.constant 1 : index
    %c0_5 = arith.constant 0 : index
    %c0_6 = arith.constant 0 : index
    %5 = vector.load %arg2[%c0_4, %c1, %c0_5, %c0_6] : memref<2x2x8x128xf32, #tpu.memory_space<vmem>>, vector<2x1x8x128xf32>
    %6 = vector.shape_cast %5 : vector<2x1x8x128xf32> to vector<2x8x128xf32>
    %7 = arith.subf %6, %4 : vector<2x8x128xf32>
    %c0_7 = arith.constant 0 : index
    %c0_8 = arith.constant 0 : index
    %c0_9 = arith.constant 0 : index
    %8 = vector.load %arg3[%c0_7, %c0_8, %c0_9] : memref<2x8x128xi32, #tpu.memory_space<vmem>>, vector<2x8x128xi32>
    %9 = arith.sitofp %8 : vector<2x8x128xi32> to vector<2x8x128xf32>
    %c1_i32 = arith.constant 1 : i32
    %10 = vector.broadcast %c1_i32 : i32 to vector<2x8x128xi32>
    %11 = arith.cmpi eq, %8, %10 : vector<2x8x128xi32>
    %12 = math.absf %7 : vector<2x8x128xf32>
    %cst = arith.constant 0.000000e+00 : f32
    %13 = vector.broadcast %cst : f32 to vector<2x8x128xf32>
    %14 = arith.subf %13, %12 : vector<2x8x128xf32>
    %15 = math.exp %14 : vector<2x8x128xf32>
    %cst_10 = arith.constant 1.000000e+00 : f32
    %16 = vector.broadcast %cst_10 : f32 to vector<2x8x128xf32>
    %17 = arith.addf %16, %15 : vector<2x8x128xf32>
    %cst_11 = arith.constant 1.000000e+00 : f32
    %18 = vector.broadcast %cst_11 : f32 to vector<2x8x128xf32>
    %19 = arith.divf %18, %17 : vector<2x8x128xf32>
    %cst_12 = arith.constant 0.000000e+00 : f32
    %20 = vector.broadcast %cst_12 : f32 to vector<2x8x128xf32>
    %21 = arith.cmpf oge, %7, %20 : vector<2x8x128xf32>
    %22 = arith.mulf %15, %19 : vector<2x8x128xf32>
    %23 = arith.select %21, %19, %22 : vector<2x8x128xi1>, vector<2x8x128xf32>
    %cst_13 = arith.constant 0.000000e+00 : f32
    %24 = vector.broadcast %cst_13 : f32 to vector<2x8x128xf32>
    %25 = arith.subf %24, %7 : vector<2x8x128xf32>
    %26 = arith.select %11, %25, %7 : vector<2x8x128xi1>, vector<2x8x128xf32>
    %cst_14 = arith.constant 0.000000e+00 : f32
    %27 = vector.broadcast %cst_14 : f32 to vector<2x8x128xf32>
    %28 = arith.maximumf %26, %27 : vector<2x8x128xf32>
    %cst_15 = arith.constant 1.000000e+00 : f32
    %29 = vector.broadcast %cst_15 : f32 to vector<2x8x128xf32>
    %30 = arith.addf %29, %15 : vector<2x8x128xf32>
    %31 = math.log %30 : vector<2x8x128xf32>
    %32 = arith.addf %28, %31 : vector<2x8x128xf32>
    %33 = tpu.iota {dimensions = array<i32: 1>} : vector<2x8x128xi32>
    %34 = tpu.iota {dimensions = array<i32: 2>} : vector<2x8x128xi32>
    %c8_i32 = arith.constant 8 : i32
    %35 = arith.muli %arg1, %c8_i32 : i32
    %36 = vector.broadcast %35 : i32 to vector<2x8x128xi32>
    %37 = arith.addi %36, %33 : vector<2x8x128xi32>
    %c128_i32 = arith.constant 128 : i32
    %38 = vector.broadcast %c128_i32 : i32 to vector<2x8x128xi32>
    %39 = arith.muli %37, %38 : vector<2x8x128xi32>
    %40 = arith.addi %39, %34 : vector<2x8x128xi32>
    %c256_i32 = arith.constant 256 : i32
    %41 = vector.broadcast %c256_i32 : i32 to vector<2x8x128xi32>
    %42 = arith.cmpi slt, %40, %41 : vector<2x8x128xi32>
    %cst_16 = arith.constant 0.000000e+00 : f32
    %43 = vector.broadcast %cst_16 : f32 to vector<2x8x128xf32>
    %44 = arith.select %42, %23, %43 : vector<2x8x128xi1>, vector<2x8x128xf32>
    %cst_17 = arith.constant 0.000000e+00 : f32
    %45 = vector.broadcast %cst_17 : f32 to vector<2x8x128xf32>
    %46 = arith.select %42, %32, %45 : vector<2x8x128xi1>, vector<2x8x128xf32>
    %47 = arith.mulf %44, %9 : vector<2x8x128xf32>
    %c0_18 = arith.constant 0 : index
    %c0_19 = arith.constant 0 : index
    %c0_20 = arith.constant 0 : index
    %c0_21 = arith.constant 0 : index
    %48 = vector.load %arg4[%c0_18, %c0_19, %c0_20, %c0_21] : memref<4x2x8x128xf32, #tpu.memory_space<vmem>>, vector<1x2x8x128xf32>
    %49 = vector.shape_cast %48 : vector<1x2x8x128xf32> to vector<2x8x128xf32>
    %50 = vector.shape_cast %47 : vector<2x8x128xf32> to vector<2x1x8x128xf32>
    %cst_22 = arith.constant dense<0.000000e+00> : vector<2x8x128xf32>
    %51 = vector.multi_reduction <add>, %50, %cst_22 [1] : vector<2x1x8x128xf32> to vector<2x8x128xf32>
    %52 = arith.addf %49, %51 : vector<2x8x128xf32>
    %c0_23 = arith.constant 0 : index
    %c0_24 = arith.constant 0 : index
    %c0_25 = arith.constant 0 : index
    %c0_26 = arith.constant 0 : index
    %53 = vector.load %arg4[%c0_23, %c0_24, %c0_25, %c0_26] : memref<4x2x8x128xf32, #tpu.memory_space<vmem>>, vector<1x2x8x128xf32>
    %54 = vector.shape_cast %53 : vector<1x2x8x128xf32> to vector<2x8x128xf32>
    %55 = vector.shape_cast %52 : vector<2x8x128xf32> to vector<1x2x8x128xf32>
    tpu.vector_store %arg4[%c0_23, %c0_24, %c0_25, %c0_26], %55 {strides = array<i32>} : memref<4x2x8x128xf32, #tpu.memory_space<vmem>>, vector<1x2x8x128xf32>,
    %c1_27 = arith.constant 1 : index
    %c0_28 = arith.constant 0 : index
    %c0_29 = arith.constant 0 : index
    %c0_30 = arith.constant 0 : index
    %56 = vector.load %arg4[%c1_27, %c0_28, %c0_29, %c0_30] : memref<4x2x8x128xf32, #tpu.memory_space<vmem>>, vector<1x2x8x128xf32>
    %57 = vector.shape_cast %56 : vector<1x2x8x128xf32> to vector<2x8x128xf32>
    %58 = vector.shape_cast %44 : vector<2x8x128xf32> to vector<2x1x8x128xf32>
    %cst_31 = arith.constant dense<0.000000e+00> : vector<2x8x128xf32>
    %59 = vector.multi_reduction <add>, %58, %cst_31 [1] : vector<2x1x8x128xf32> to vector<2x8x128xf32>
    %60 = arith.addf %57, %59 : vector<2x8x128xf32>
    %c1_32 = arith.constant 1 : index
    %c0_33 = arith.constant 0 : index
    %c0_34 = arith.constant 0 : index
    %c0_35 = arith.constant 0 : index
    %61 = vector.load %arg4[%c1_32, %c0_33, %c0_34, %c0_35] : memref<4x2x8x128xf32, #tpu.memory_space<vmem>>, vector<1x2x8x128xf32>
    %62 = vector.shape_cast %61 : vector<1x2x8x128xf32> to vector<2x8x128xf32>
    %63 = vector.shape_cast %60 : vector<2x8x128xf32> to vector<1x2x8x128xf32>
    tpu.vector_store %arg4[%c1_32, %c0_33, %c0_34, %c0_35], %63 {strides = array<i32>} : memref<4x2x8x128xf32, #tpu.memory_space<vmem>>, vector<1x2x8x128xf32>,
    %c2 = arith.constant 2 : index
    %c0_36 = arith.constant 0 : index
    %c0_37 = arith.constant 0 : index
    %c0_38 = arith.constant 0 : index
    %64 = vector.load %arg4[%c2, %c0_36, %c0_37, %c0_38] : memref<4x2x8x128xf32, #tpu.memory_space<vmem>>, vector<1x2x8x128xf32>
    %65 = vector.shape_cast %64 : vector<1x2x8x128xf32> to vector<2x8x128xf32>
    %66 = vector.shape_cast %9 : vector<2x8x128xf32> to vector<2x1x8x128xf32>
    %cst_39 = arith.constant dense<0.000000e+00> : vector<2x8x128xf32>
    %67 = vector.multi_reduction <add>, %66, %cst_39 [1] : vector<2x1x8x128xf32> to vector<2x8x128xf32>
    %68 = arith.addf %65, %67 : vector<2x8x128xf32>
    %c2_40 = arith.constant 2 : index
    %c0_41 = arith.constant 0 : index
    %c0_42 = arith.constant 0 : index
    %c0_43 = arith.constant 0 : index
    %69 = vector.load %arg4[%c2_40, %c0_41, %c0_42, %c0_43] : memref<4x2x8x128xf32, #tpu.memory_space<vmem>>, vector<1x2x8x128xf32>
    %70 = vector.shape_cast %69 : vector<1x2x8x128xf32> to vector<2x8x128xf32>
    %71 = vector.shape_cast %68 : vector<2x8x128xf32> to vector<1x2x8x128xf32>
    tpu.vector_store %arg4[%c2_40, %c0_41, %c0_42, %c0_43], %71 {strides = array<i32>} : memref<4x2x8x128xf32, #tpu.memory_space<vmem>>, vector<1x2x8x128xf32>,
    %c3 = arith.constant 3 : index
    %c0_44 = arith.constant 0 : index
    %c0_45 = arith.constant 0 : index
    %c0_46 = arith.constant 0 : index
    %72 = vector.load %arg4[%c3, %c0_44, %c0_45, %c0_46] : memref<4x2x8x128xf32, #tpu.memory_space<vmem>>, vector<1x2x8x128xf32>
    %73 = vector.shape_cast %72 : vector<1x2x8x128xf32> to vector<2x8x128xf32>
    %74 = vector.shape_cast %46 : vector<2x8x128xf32> to vector<2x1x8x128xf32>
    %cst_47 = arith.constant dense<0.000000e+00> : vector<2x8x128xf32>
    %75 = vector.multi_reduction <add>, %74, %cst_47 [1] : vector<2x1x8x128xf32> to vector<2x8x128xf32>
    %76 = arith.addf %73, %75 : vector<2x8x128xf32>
    %c3_48 = arith.constant 3 : index
    %c0_49 = arith.constant 0 : index
    %c0_50 = arith.constant 0 : index
    %c0_51 = arith.constant 0 : index
    %77 = vector.load %arg4[%c3_48, %c0_49, %c0_50, %c0_51] : memref<4x2x8x128xf32, #tpu.memory_space<vmem>>, vector<1x2x8x128xf32>
    %78 = vector.shape_cast %77 : vector<1x2x8x128xf32> to vector<2x8x128xf32>
    %79 = vector.shape_cast %76 : vector<2x8x128xf32> to vector<1x2x8x128xf32>
    tpu.vector_store %arg4[%c3_48, %c0_49, %c0_50, %c0_51], %79 {strides = array<i32>} : memref<4x2x8x128xf32, #tpu.memory_space<vmem>>, vector<1x2x8x128xf32>,
    return
  }
  func.func @transform_0(%arg0: i32, %arg1: i32) -> (i32, i32, i32, i32) {
    %c0_i32 = arith.constant 0 : i32
    %c0_i32_0 = arith.constant 0 : i32
    %c0_i32_1 = arith.constant 0 : i32
    return %arg0, %c0_i32, %arg1, %c0_i32_0 : i32, i32, i32, i32
  }
  func.func @transform_1(%arg0: i32, %arg1: i32) -> (i32, i32, i32) {
    %c0_i32 = arith.constant 0 : i32
    %c0_i32_0 = arith.constant 0 : i32
    return %arg0, %arg1, %c0_i32 : i32, i32, i32
  }
  func.func @transform_2(%arg0: i32, %arg1: i32) -> (i32, i32, i32, i32) {
    %c0_i32 = arith.constant 0 : i32
    %c0_i32_0 = arith.constant 0 : i32
    %c0_i32_1 = arith.constant 0 : i32
    %c0_i32_2 = arith.constant 0 : i32
    return %c0_i32, %arg0, %c0_i32_0, %c0_i32_1 : i32, i32, i32, i32
  }
}

</mosaic_0001>

<llo_original>
// kernel: combined_loss.1
$region0: #{combined_loss.1}
  #allocation0 [shape = 'u32[]', space=smem, size = 0x4, offset = 0x4, fixed_abs, tag = 'smem constant byte address 0x4 - core index']
  #allocation1 [shape = 'u32[144,128]{1,0:T(1,128)}', space=vmem, size = 0x12000, scoped, tag = 'internal scratch']
  %s0 = inlined_call_operand.vmem [shape: f32[2,2,8,128], index: 0, kind: input, shape index: {}]
  %s1 = inlined_call_operand.vmem [shape: s32[2,8,128], index: 1, kind: input, shape index: {}]
  %s2 = inlined_call_operand.vmem [shape: f32[4,2,8,128], index: 2, kind: output, shape index: {}]
  %s3 = sld [smem:[#allocation0]]
  $region22: #{combined_loss.1} parent=0
    _
  %s5 = ssub.s32 1, %s3
  %s6 = scalar_select 0, %s5, %s3
  // Predicated region
  $region2: #{combined_loss.1} parent=0 // pred_check
    _
  $region3: #{combined_loss.1} parent=0 // pred_check_branch
    %8 = sbr.rel (0) target = $region5
  $region4: #{combined_loss.1} parent=0 // pred_region
    _
  $region5: #{combined_loss.1} parent=0 // pred_fallthru
    _
  // Predicated region
  $region6: #{combined_loss.1} parent=0 // pred_check
    _
  $region7: #{combined_loss.1} parent=0 // pred_check_branch
    %10 = sbr.rel (0) target = $region9
  $region8: #{combined_loss.1} parent=0 // pred_region
    _
  $region9: #{combined_loss.1} parent=0 // pred_fallthru
    _
  %p11 = scmp.eq.s32.totalorder 0, 0
  // Predicated region
  $region10: #{combined_loss.1} parent=0 // pred_check
    %p12 = pneg %p11
  $region11: #{combined_loss.1} parent=0 // pred_check_branch
    %14 = sbr.rel (%p12) target = $region13
  $region12: #{combined_loss.1} parent=0 // pred_region
    %15 = vst [vmem:[%s2] sm:$0xff] 0.0
    %16 = vst [vmem:[%s2 + $0x8] sm:$0xff] 0.0
    %17 = vst [vmem:[%s2 + $0x10] sm:$0xff] 0.0
    %18 = vst [vmem:[%s2 + $0x18] sm:$0xff] 0.0
    %19 = vst [vmem:[%s2 + $0x20] sm:$0xff] 0.0
    %20 = vst [vmem:[%s2 + $0x28] sm:$0xff] 0.0
    %21 = vst [vmem:[%s2 + $0x30] sm:$0xff] 0.0
    %22 = vst [vmem:[%s2 + $0x38] sm:$0xff] 0.0
  $region13: #{combined_loss.1} parent=0 // pred_fallthru
    _
  %v23 = vld [vmem:[%s0] sm:$0xff]
  %v24 = vld [vmem:[%s0 + $0x10] sm:$0xff]
  %s25 = scalar_lea.vmem %s0, 8
  %v26 = vld [vmem:[%s25] sm:$0xff]
  %v27 = vld [vmem:[%s25 + $0x10] sm:$0xff]
  %v28 = vsub.f32 %v26, %v23
  %v29 = vsub.f32 %v27, %v24
  %v30 = vld [vmem:[%s1] sm:$0xff]
  %v31 = vld [vmem:[%s1 + $0x8] sm:$0xff]
  %v32 = vcvt.s32.f32 %v30
  %v33 = vcvt.s32.f32 %v31
  %vm34 = vcmp.eq.s32.totalorder %v30, 1
  %vm35 = vcmp.eq.s32.totalorder %v31, 1
  %v36 = vand.u32 2147483647, %v28
  %v37 = vand.u32 2147483647, %v29
  %v38 = vsub.f32 0.0, %v36
  %v39 = vsub.f32 0.0, %v37
  %v40 = vmul.f32 %v38, 1.442695
  %v41 = vpow.pop %v40
  %v42 = vmul.f32 %v39, 1.442695
  %v43 = vpow.pop %v42
  %v44 = vadd.f32 %v41, 1.0
  %v45 = vadd.f32 %v43, 1.0
  %v46 = vrcp.pop %v44
  %v47 = vmul.f32 1.0, %v46
  %v48 = vrcp.pop %v45
  %v49 = vmul.f32 1.0, %v48
  %vm50 = vcmp.ge.f32.partialorder %v28, 0.0
  %vm51 = vcmp.ge.f32.partialorder %v29, 0.0
  %v52 = vmul.f32 %v41, %v47
  %v53 = vmul.f32 %v43, %v49
  %v54 = vsel %vm50, %v47, %v52
  %v55 = vsel %vm51, %v49, %v53
  %v56 = vsub.f32 0.0, %v28
  %v57 = vsub.f32 0.0, %v29
  %v58 = vsel %vm34, %v56, %v28
  %v59 = vsel %vm35, %v57, %v29
  %v60 = vmax.f32 %v58, 0.0
  %v61 = vmax.f32 %v59, 0.0
  %v62 = vlog2.pop %v44
  %v63 = vmul.f32 %v62, 0.6931472
  %v64 = vlog2.pop %v45
  %v65 = vmul.f32 %v64, 0.6931472
  %v66 = vadd.f32 %v60, %v63
  %v67 = vadd.f32 %v61, %v65
  %v68 = vlaneseq
  %v69 = vshrl.u32 %v68, 7
  %v70 = vlaneseq
  %v71 = vand.u32 %v70, 127
  %s72 = smul.u32 0, 8
  %v73 = vstv %s72
  %v74 = vadd.s32 %v73, %v69
  %v75 = vmul.u32 %v74, 128
  %v76 = vadd.s32 %v75, %v71
  %vm77 = vcmp.lt.s32.totalorder %v76, 256
  %v78 = vsel %vm77, %v54, 0.0
  %v79 = vsel %vm77, %v55, 0.0
  %v80 = vsel %vm77, %v66, 0.0
  %v81 = vsel %vm77, %v67, 0.0
  %v82 = vmul.f32 %v78, %v32
  %v83 = vmul.f32 %v79, %v33
  %v84 = vld [vmem:[%s2] sm:$0xff]
  %v85 = vld [vmem:[%s2 + $0x8] sm:$0xff]
  %v86 = vadd.f32 %v82, 0.0
  %v87 = vadd.f32 %v83, 0.0
  %v88 = vadd.f32 %v84, %v86
  %v89 = vadd.f32 %v85, %v87
  %90 = vst [vmem:[%s2] sm:$0xff] %v88
  %91 = vst [vmem:[%s2 + $0x8] sm:$0xff] %v89
  %s92 = scalar_lea.vmem %s2, 16
  %v93 = vld [vmem:[%s92] sm:$0xff]
  %v94 = vld [vmem:[%s92 + $0x8] sm:$0xff]
  %v95 = vadd.f32 %v78, 0.0
  %v96 = vadd.f32 %v79, 0.0
  %v97 = vadd.f32 %v93, %v95
  %v98 = vadd.f32 %v94, %v96
  %99 = vst [vmem:[%s92] sm:$0xff] %v97
  %100 = vst [vmem:[%s92 + $0x8] sm:$0xff] %v98
  %s101 = scalar_lea.vmem %s2, 32
  %v102 = vld [vmem:[%s101] sm:$0xff]
  %v103 = vld [vmem:[%s101 + $0x8] sm:$0xff]
  %v104 = vadd.f32 %v32, 0.0
  %v105 = vadd.f32 %v33, 0.0
  %v106 = vadd.f32 %v102, %v104
  %v107 = vadd.f32 %v103, %v105
  %108 = vst [vmem:[%s101] sm:$0xff] %v106
  %109 = vst [vmem:[%s101 + $0x8] sm:$0xff] %v107
  %s110 = scalar_lea.vmem %s2, 48
  %v111 = vld [vmem:[%s110] sm:$0xff]
  %v112 = vld [vmem:[%s110 + $0x8] sm:$0xff]
  %v113 = vadd.f32 %v80, 0.0
  %v114 = vadd.f32 %v81, 0.0
  %v115 = vadd.f32 %v111, %v113
  %v116 = vadd.f32 %v112, %v114
  %117 = vst [vmem:[%s110] sm:$0xff] %v115
  %118 = vst [vmem:[%s110 + $0x8] sm:$0xff] %v116
  // Predicated region
  $region14: #{combined_loss.1} parent=0 // pred_check
    _
  $region15: #{combined_loss.1} parent=0 // pred_check_branch
    %120 = sbr.rel (0) target = $region17
  $region16: #{combined_loss.1} parent=0 // pred_region
    _
  $region17: #{combined_loss.1} parent=0 // pred_fallthru
    _
  // Predicated region
  $region18: #{combined_loss.1} parent=0 // pred_check
    _
  $region19: #{combined_loss.1} parent=0 // pred_check_branch
    %122 = sbr.rel (0) target = $region21
  $region20: #{combined_loss.1} parent=0 // pred_region
    _
  $region21: #{combined_loss.1} parent=0 // pred_fallthru
    _

</llo_original>
